<compile_context>
chip_gen: v7x
topology: tpu7x:2x2x1
jax: 0.10.0
libtpu: 0.0.40
codegen_flags: <defaults>
</compile_context>

<pallas_src>
import math

import jax
import jax.numpy as jnp
from jax.experimental import pallas as pl
from jax.experimental.pallas import tpu as pltpu

_EPS = 1e-12
_LOG_EPS = math.log(1e-12)     # log of the confidence clamp floor
_T_MIN = 1e-4                  # torch clamps the (soft) one-hot to [1e-4, 1]
_LOG_T_MIN = math.log(1e-4)


def _round_up(x, m):
    return ((x + m - 1) // m) * m


# --------------------------------------------------------------------------
# In-kernel helpers (traced into the kernel bodies).
# --------------------------------------------------------------------------
def _confidence_terms(conf_raw):
    """conf_raw: (1, tb) raw confidence logits -> (clamped sigmoid, log)."""
    e_neg = jnp.exp(-conf_raw)
    # confidence = clamp(sigmoid(raw), eps, 1-eps);
    # log(confidence) = -log(1 + exp(-raw)) reuses the same exp.
    conf = jnp.clip(pl.reciprocal(1.0 + e_neg), _EPS, 1.0 - _EPS)
    log_conf = jnp.clip(-jnp.log(1.0 + e_neg), _LOG_EPS, 0.0)
    return conf, log_conf


def _softmax_cols(x):
    """x: (C, tb); clamped softmax over the class (sublane) axis."""
    m = jnp.max(x, axis=0, keepdims=True)
    e = jnp.exp(x - m)
    sm = e * pl.reciprocal(jnp.sum(e, axis=0, keepdims=True))
    return jnp.clip(sm, _EPS, 1.0 - _EPS)


# --------------------------------------------------------------------------
# Kernels.  Layout inside a tile: class axis = sublanes, batch axis = lanes.
# Each tile emits one fused, *unscaled* partial sum into a lane/sublane-dense
# (8, 128) slab; the wrapper sums the slabs and applies the -1/B scaling.
# --------------------------------------------------------------------------
def _nal_onehot_kernel(scal_ref, nvalid_ref, conf_ref, logits_ref, labels_ref,
                       out_ref):
    """epoch < es path: one-hot target rebuilt in-kernel from int labels."""
    lam = scal_ref[0]
    beta = scal_ref[1]
    n_valid = nvalid_ref[0]
    c, tb = logits_ref.shape

    # Batch-validity mask for the (possibly ragged) tail tile.  Select, not
    # multiply-by-mask, so garbage/NaN tail reads never reach the reduction.
    col0 = pl.program_id(0) * tb
    cols = col0 + jax.lax.broadcasted_iota(jnp.int32, (1, tb), 1)
    valid = cols < n_valid                                    # (1, tb)

    conf_raw = conf_ref[...].astype(jnp.float32)              # (1, tb)
    x = logits_ref[...].astype(jnp.float32)                   # (C, tb)
    labels = labels_ref[...]                                  # (1, tb) int32

    conf, log_conf = _confidence_terms(conf_raw)
    sm = _softmax_cols(x)

    # Clamped one-hot built in-kernel: 1.0 on the label row, 1e-4 elsewhere.
    class_ids = jax.lax.broadcasted_iota(jnp.int32, (c, tb), 0)
    is_label = class_ids == labels                            # (C, tb)
    t = jnp.where(is_label, 1.0, _T_MIN)

    pred = jnp.clip(conf * sm + (1.0 - conf) * t, 1e-7, 1.0)

    # loss1 contribution: log(pred) * t        (one log per element)
    # rce   contribution: pred * log(t) == log(1e-4) * pred off-label
    #                     -> no per-element log, scalar factor hoisted.
    loss1_el = jnp.where(valid, jnp.log(pred) * t, 0.0)
    rce_el = jnp.where(jnp.logical_and(valid, jnp.logical_not(is_label)),
                       pred, 0.0)
    log_conf = jnp.where(valid, log_conf, 0.0)

    partial = (jnp.sum(loss1_el)
               + (beta * _LOG_T_MIN) * jnp.sum(rce_el)
               + lam * jnp.sum(log_conf))

    # Lane/sublane-dense per-tile output slab (unmasked stores).
    out_ref[...] = jnp.full(out_ref.shape, partial, dtype=jnp.float32)


def _nal_soft_kernel(scal_ref, nvalid_ref, conf_ref, logits_ref, target_ref,
                     out_ref):
    """epoch >= es path: dense soft-label target (needs the per-element log)."""
    lam = scal_ref[0]
    beta = scal_ref[1]
    n_valid = nvalid_ref[0]
    c, tb = logits_ref.shape

    col0 = pl.program_id(0) * tb
    cols = col0 + jax.lax.broadcasted_iota(jnp.int32, (1, tb), 1)
    valid = cols < n_valid                                    # (1, tb)

    conf_raw = conf_ref[...].astype(jnp.float32)              # (1, tb)
    x = logits_ref[...].astype(jnp.float32)                   # (C, tb)
    t = jnp.clip(target_ref[...].astype(jnp.float32), _T_MIN, 1.0)

    conf, log_conf = _confidence_terms(conf_raw)
    sm = _softmax_cols(x)

    pred = jnp.clip(conf * sm + (1.0 - conf) * t, 1e-7, 1.0)

    fused = jnp.log(pred) * t + beta * (pred * jnp.log(t))    # (C, tb)
    fused = jnp.where(valid, fused, 0.0)
    log_conf = jnp.where(valid, log_conf, 0.0)

    partial = jnp.sum(fused) + lam * jnp.sum(log_conf)
    out_ref[...] = jnp.full(out_ref.shape, partial, dtype=jnp.float32)


# --------------------------------------------------------------------------
# Wrapper: lane-dense layout, bytes-budget tiling, no padding.
# --------------------------------------------------------------------------
def _block_and_vmem_budget():
    """Per-generation budgets.  Default is v7x-safe (64 MiB physical VMEM);
    bump only when a v5e/v6e (128 MiB physical) is positively detected."""
    block_bytes, vmem_limit = 2 * 1024 * 1024, 32 * 1024 * 1024
    try:
        kind = jax.devices()[0].device_kind.lower()
    except Exception:
        return block_bytes, vmem_limit
    if any(tag in kind for tag in ("v5 lite", "v5e", "v5litepod",
                                   "v6 lite", "v6e")):
        block_bytes, vmem_limit = 4 * 1024 * 1024, 64 * 1024 * 1024
    return block_bytes, vmem_limit


def _choose_tb(b, c, itemsize, block_bytes):
    """Batch tile (lane axis): multiple of 128, sized by a bytes budget."""
    if b <= 128:
        return b          # single full-extent block; no ragged lanes at all
    tb = max(128, (block_bytes // max(1, c * itemsize)) // 128 * 128)
    b128 = _round_up(b, 128)
    if b128 >= 256:
        # Keep >= 2 grid tiles so the "parallel" axis can shard across both
        # TensorCores on v7x (no-op once the bytes budget is the binding cap).
        tb = min(tb, _round_up(-(-b128 // 2), 128))
    return min(tb, b128)


def _run_nal_kernel(kernel, confidence, logits, third, lam, beta, *,
                    third_is_labels):
    b, c = logits.shape
    assert confidence.shape == (b, 1)

    # Lane-dense layout: batch on the 128-lane axis.  (B,1)->(1,B) is a pure
    # reshape; (B,C)->(C,B) is cheap XLA layout plumbing that lets every vreg
    # in the EUP-bound hot loop be fully populated even for C ~ 10.
    conf_t = confidence.reshape(1, b)
    logits_t = logits.T
    if third_is_labels:
        third_t = third.reshape(1, b).astype(jnp.int32)
        third_rows = 1
    else:
        third_t = third.T
        third_rows = c

    block_bytes, vmem_limit = _block_and_vmem_budget()
    itemsize = jnp.dtype(logits.dtype).itemsize
    tb = _choose_tb(b, c, itemsize, block_bytes)
    num_tiles = (b + tb - 1) // tb     # ragged tail handled in-kernel (select)

    # Scalars live in SMEM (no recompile when lam / beta / batch change).
    scal = jnp.array([lam, beta], dtype=jnp.float32)
    nvalid = jnp.array([b], dtype=jnp.int32)

    n_trans = (2 if third_is_labels else 3) * b * c + 2 * b
    bytes_in = (logits_t.size * itemsize
                + third_t.size * third_t.dtype.itemsize
                + conf_t.size * conf_t.dtype.itemsize)
    cost = pl.CostEstimate(
        flops=12 * b * c,
        transcendentals=n_trans,
        bytes_accessed=bytes_in + num_tiles * 8 * 128 * 4,
    )

    grid_spec = pltpu.PrefetchScalarGridSpec(
        num_scalar_prefetch=2,
        grid=(num_tiles,),
        in_specs=[
            pl.BlockSpec((1, tb), lambda i, *_: (0, i)),            # confidence
            pl.BlockSpec((c, tb), lambda i, *_: (0, i)),            # logits
            pl.BlockSpec((third_rows, tb), lambda i, *_: (0, i)),   # labels/target
        ],
        out_specs=pl.BlockSpec((1, 8, 128), lambda i, *_: (i, 0, 0)),
    )

    partials = pl.pallas_call(
        kernel,
        out_shape=jax.ShapeDtypeStruct((num_tiles, 8, 128), jnp.float32),
        grid_spec=grid_spec,
        compiler_params=pltpu.CompilerParams(
            dimension_semantics=("parallel",),
            vmem_limit_bytes=vmem_limit,
        ),
        cost_estimate=cost,
    )(scal, nvalid, conf_t, logits_t, third_t)

    # Tiny finalize in plain JAX: sum per-tile partials, scale by -1/B.
    return -(jnp.sum(partials[:, 0, 0]) / jnp.float32(b))


def nal_loss_onehot_pallas(confidence, logits, labels, lam, beta):
    """epoch < es: integer labels only — no (B, C) target DMA, no log(t)."""
    return _run_nal_kernel(_nal_onehot_kernel, confidence, logits, labels,
                           lam, beta, third_is_labels=True)


def nal_loss_soft_pallas(confidence, logits, target, lam, beta):
    """epoch >= es: dense soft-label target."""
    return _run_nal_kernel(_nal_soft_kernel, confidence, logits, target,
                           lam, beta, third_is_labels=False)


class NAL:
    """JAX port of the PyTorch NAL module (soft_labels kept as a jnp array)."""

    def __init__(self, labels, num_classes, es=60, momentum=0.9, beta=0.1,
                 threshold_update=0.0):
        self.num_classes = num_classes
        # soft_labels[i, labels[i]] = 1  (deterministic init from labels)
        self.soft_labels = jax.nn.one_hot(
            jnp.asarray(labels), num_classes, dtype=jnp.float32)
        self.es = es
        self.momentum = momentum
        self.beta = beta
        self.threshold_update = threshold_update

    def forward(self, confidence, logits, labels, index, lam, epoch):
        b = labels.shape[0]
        if epoch < self.es:
            # One-hot regime: the kernel rebuilds the clamped one-hot in
            # VMEM from the int labels (cheapest path, no target traffic).
            return nal_loss_onehot_pallas(confidence, logits, labels, lam,
                                          self.beta)
        if epoch > 0:
            # Stateful soft-label momentum update (glue, plain JAX scatter).
            # TODO(synk): the scatter update stays in XLA; it is state
            # management, not a hot elementwise path.
            eps = 1e-12
            conf_s = jnp.clip(jax.nn.sigmoid(confidence), eps, 1.0 - eps)
            temp_p = jax.nn.softmax(logits, axis=1)
            tp_f = (conf_s > self.threshold_update).reshape(b, 1)
            cur = self.soft_labels[index]
            new = self.momentum * cur + (1.0 - self.momentum) * temp_p
            updated = jnp.where(tp_f, new, cur)
            self.soft_labels = jnp.clip(
                self.soft_labels.at[index].set(updated), 0.0001, 1.0)
        target = self.soft_labels[index]
        return nal_loss_soft_pallas(confidence, logits, target, lam, self.beta)


def _reference_loss(confidence, logits, target, lam, beta):
    """Pure-JAX reference for validation (target already clamped)."""
    eps = 1e-12
    conf = jnp.clip(jax.nn.sigmoid(confidence), eps, 1.0 - eps)
    out = jnp.clip(jax.nn.softmax(logits, axis=1), eps, 1.0 - eps)
    pred = jnp.clip(conf * out + (1.0 - conf) * target, 1e-7, 1.0)
    loss1 = -jnp.mean(jnp.sum(jnp.log(pred) * target, axis=1))
    rce = -jnp.sum(pred * jnp.log(target), axis=1)
    loss2 = -jnp.mean(jnp.log(conf))
    return loss1 + lam * loss2 + beta * jnp.mean(rce)


if __name__ == "__main__":
    key = jax.random.PRNGKey(0)
    k1, k2, k3, k4 = jax.random.split(key, 4)

    B, C = 8, 10
    confidence = jax.random.normal(k1, (B, 1), dtype=jnp.float32)
    logits = jax.random.normal(k2, (B, C), dtype=jnp.float32)
    labels = jax.random.randint(k3, (B,), 0, C)
    index = jnp.arange(B, dtype=jnp.int32)
    lam = 0.5
    epoch = 0  # epoch < es branch (one-hot kernel)

    nal = NAL(labels=labels, num_classes=C, es=60, momentum=0.9, beta=0.1,
              threshold_update=0.0)

    loss = jax.block_until_ready(
        nal.forward(confidence, logits, labels, index, lam, epoch))

    one_hot = jnp.clip(jax.nn.one_hot(labels, C, dtype=jnp.float32),
                       _T_MIN, 1.0)
    ref = _reference_loss(confidence, logits, one_hot, lam, 0.1)
    assert jnp.allclose(loss, ref, atol=1e-4, rtol=1e-4), (loss, ref)

    # Also exercise the soft-label kernel once (epoch >= es regime math).
    soft = jnp.clip(jax.random.uniform(k4, (B, C), dtype=jnp.float32),
                    _T_MIN, 1.0)
    loss_soft = jax.block_until_ready(
        nal_loss_soft_pallas(confidence, logits, soft, 0.3, 0.1))
    ref_soft = _reference_loss(confidence, logits, soft, 0.3, 0.1)
    assert jnp.allclose(loss_soft, ref_soft, atol=1e-4, rtol=1e-4), (
        loss_soft, ref_soft)

    print("KERNEL_OK")
</pallas_src>

<mosaic_0001>
module attributes {stable_mosaic.version = 11 : i64} {
  func.func @_nal_onehot_kernel(%arg0: i32, %arg1: memref<2xf32, #tpu.memory_space<smem>>, %arg2: memref<1xi32, #tpu.memory_space<smem>>, %arg3: memref<1x8xf32, #tpu.memory_space<vmem>>, %arg4: memref<10x8xf32, #tpu.memory_space<vmem>>, %arg5: memref<1x8xi32, #tpu.memory_space<vmem>>, %arg6: memref<1x8x128xf32, #tpu.memory_space<vmem>>) attributes {dimension_semantics = [#tpu.dimension_semantics<parallel>], iteration_bounds = array<i64: 1>, scalar_prefetch = 2 : i64, scratch_operands = 0 : i64, tpu.core_type = #tpu.core_type<tc>, window_params = [{transform_indices = @transform_0, window_bounds = array<i64: 1, 8>}, {transform_indices = @transform_1, window_bounds = array<i64: 10, 8>}, {transform_indices = @transform_2, window_bounds = array<i64: 1, 8>}, {transform_indices = @transform_3, window_bounds = array<i64: 1, 8, 128>}]} {
    %c0 = arith.constant 0 : index
    %0 = memref.load %arg1[%c0] : memref<2xf32, #tpu.memory_space<smem>>
    %c1 = arith.constant 1 : index
    %1 = memref.load %arg1[%c1] : memref<2xf32, #tpu.memory_space<smem>>
    %c0_0 = arith.constant 0 : index
    %2 = memref.load %arg2[%c0_0] : memref<1xi32, #tpu.memory_space<smem>>
    %c8_i32 = arith.constant 8 : i32
    %3 = arith.muli %arg0, %c8_i32 : i32
    %4 = tpu.iota {dimensions = array<i32: 1>} : vector<1x8xi32>
    %5 = vector.broadcast %3 : i32 to vector<1x8xi32>
    %6 = arith.addi %5, %4 : vector<1x8xi32>
    %7 = vector.broadcast %2 : i32 to vector<1x8xi32>
    %8 = arith.cmpi slt, %6, %7 : vector<1x8xi32>
    %c0_1 = arith.constant 0 : index
    %c0_2 = arith.constant 0 : index
    %9 = vector.load %arg3[%c0_1, %c0_2] : memref<1x8xf32, #tpu.memory_space<vmem>>, vector<1x8xf32>
    %c0_3 = arith.constant 0 : index
    %c0_4 = arith.constant 0 : index
    %10 = vector.load %arg4[%c0_3, %c0_4] : memref<10x8xf32, #tpu.memory_space<vmem>>, vector<10x8xf32>
    %c0_5 = arith.constant 0 : index
    %c0_6 = arith.constant 0 : index
    %11 = vector.load %arg5[%c0_5, %c0_6] : memref<1x8xi32, #tpu.memory_space<vmem>>, vector<1x8xi32>
    %cst = arith.constant 0.000000e+00 : f32
    %12 = vector.broadcast %cst : f32 to vector<1x8xf32>
    %13 = arith.subf %12, %9 : vector<1x8xf32>
    %14 = math.exp %13 : vector<1x8xf32>
    %cst_7 = arith.constant 1.000000e+00 : f32
    %15 = vector.broadcast %cst_7 : f32 to vector<1x8xf32>
    %16 = arith.addf %15, %14 : vector<1x8xf32>
    %17 = tpu.reciprocal %16 : vector<1x8xf32> -> vector<1x8xf32>
    %cst_8 = arith.constant 9.99999996E-13 : f32
    %cst_9 = arith.constant 1.000000e+00 : f32
    %18 = vector.broadcast %cst_8 : f32 to vector<1x8xf32>
    %19 = arith.maximumf %18, %17 : vector<1x8xf32>
    %20 = vector.broadcast %cst_9 : f32 to vector<1x8xf32>
    %21 = arith.minimumf %20, %19 : vector<1x8xf32>
    %cst_10 = arith.constant 1.000000e+00 : f32
    %22 = vector.broadcast %cst_10 : f32 to vector<1x8xf32>
    %23 = arith.addf %22, %14 : vector<1x8xf32>
    %24 = math.log %23 : vector<1x8xf32>
    %cst_11 = arith.constant 0.000000e+00 : f32
    %25 = vector.broadcast %cst_11 : f32 to vector<1x8xf32>
    %26 = arith.subf %25, %24 : vector<1x8xf32>
    %cst_12 = arith.constant -27.6310215 : f32
    %cst_13 = arith.constant 0.000000e+00 : f32
    %27 = vector.broadcast %cst_12 : f32 to vector<1x8xf32>
    %28 = arith.maximumf %27, %26 : vector<1x8xf32>
    %29 = vector.broadcast %cst_13 : f32 to vector<1x8xf32>
    %30 = arith.minimumf %29, %28 : vector<1x8xf32>
    %cst_14 = arith.constant dense<0xFF800000> : vector<8xf32>
    %31 = vector.multi_reduction <maximumf>, %10, %cst_14 [0] : vector<10x8xf32> to vector<8xf32>
    %32 = vector.shape_cast %31 : vector<8xf32> to vector<1x8xf32>
    %33 = vector.broadcast %32 : vector<1x8xf32> to vector<10x8xf32>
    %34 = arith.subf %10, %33 : vector<10x8xf32>
    %35 = math.exp %34 : vector<10x8xf32>
    %cst_15 = arith.constant dense<0.000000e+00> : vector<8xf32>
    %36 = vector.multi_reduction <add>, %35, %cst_15 [0] : vector<10x8xf32> to vector<8xf32>
    %37 = vector.shape_cast %36 : vector<8xf32> to vector<1x8xf32>
    %38 = tpu.reciprocal %37 : vector<1x8xf32> -> vector<1x8xf32>
    %39 = vector.broadcast %38 : vector<1x8xf32> to vector<10x8xf32>
    %40 = arith.mulf %35, %39 : vector<10x8xf32>
    %cst_16 = arith.constant 9.99999996E-13 : f32
    %cst_17 = arith.constant 1.000000e+00 : f32
    %41 = vector.broadcast %cst_16 : f32 to vector<10x8xf32>
    %42 = arith.maximumf %41, %40 : vector<10x8xf32>
    %43 = vector.broadcast %cst_17 : f32 to vector<10x8xf32>
    %44 = arith.minimumf %43, %42 : vector<10x8xf32>
    %45 = tpu.iota {dimensions = array<i32: 0>} : vector<10x8xi32>
    %46 = vector.broadcast %11 : vector<1x8xi32> to vector<10x8xi32>
    %47 = arith.cmpi eq, %45, %46 : vector<10x8xi32>
    %cst_18 = arith.constant 1.000000e+00 : f32
    %cst_19 = arith.constant 9.99999974E-5 : f32
    %48 = vector.broadcast %cst_18 : f32 to vector<10x8xf32>
    %49 = vector.broadcast %cst_19 : f32 to vector<10x8xf32>
    %50 = arith.select %47, %48, %49 : vector<10x8xi1>, vector<10x8xf32>
    %51 = vector.broadcast %21 : vector<1x8xf32> to vector<10x8xf32>
    %52 = arith.mulf %51, %44 : vector<10x8xf32>
    %cst_20 = arith.constant 1.000000e+00 : f32
    %53 = vector.broadcast %cst_20 : f32 to vector<1x8xf32>
    %54 = arith.subf %53, %21 : vector<1x8xf32>
    %55 = vector.broadcast %54 : vector<1x8xf32> to vector<10x8xf32>
    %56 = arith.mulf %55, %50 : vector<10x8xf32>
    %57 = arith.addf %52, %56 : vector<10x8xf32>
    %cst_21 = arith.constant 1.000000e-07 : f32
    %cst_22 = arith.constant 1.000000e+00 : f32
    %58 = vector.broadcast %cst_21 : f32 to vector<10x8xf32>
    %59 = arith.maximumf %58, %57 : vector<10x8xf32>
    %60 = vector.broadcast %cst_22 : f32 to vector<10x8xf32>
    %61 = arith.minimumf %60, %59 : vector<10x8xf32>
    %62 = math.log %61 : vector<10x8xf32>
    %63 = arith.mulf %62, %50 : vector<10x8xf32>
    %cst_23 = arith.constant 0.000000e+00 : f32
    %64 = vector.shape_cast %8 : vector<1x8xi1> to vector<1x8xi1>
    %65 = vector.broadcast %64 : vector<1x8xi1> to vector<10x8xi1>
    %66 = vector.broadcast %cst_23 : f32 to vector<10x8xf32>
    %67 = arith.select %65, %63, %66 : vector<10x8xi1>, vector<10x8xf32>
    %cst_24 = arith.constant dense<true> : vector<10x8xi1>
    %68 = arith.xori %47, %cst_24 : vector<10x8xi1>
    %69 = vector.broadcast %8 : vector<1x8xi1> to vector<10x8xi1>
    %70 = arith.andi %69, %68 : vector<10x8xi1>
    %cst_25 = arith.constant 0.000000e+00 : f32
    %71 = vector.broadcast %cst_25 : f32 to vector<10x8xf32>
    %72 = arith.select %70, %61, %71 : vector<10x8xi1>, vector<10x8xf32>
    %cst_26 = arith.constant 0.000000e+00 : f32
    %73 = vector.broadcast %cst_26 : f32 to vector<1x8xf32>
    %74 = arith.select %8, %30, %73 : vector<1x8xi1>, vector<1x8xf32>
    %75 = vector.shape_cast %67 : vector<10x8xf32> to vector<1x10x8xf32>
    %cst_27 = arith.constant dense<0.000000e+00> : vector<1xf32>
    %76 = vector.multi_reduction <add>, %75, %cst_27 [1, 2] : vector<1x10x8xf32> to vector<1xf32>
    %77 = vector.shape_cast %76 : vector<1xf32> to vector<1x1x1xf32>
    %78 = vector.extract %77[0, 0, 0] : f32 from vector<1x1x1xf32>
    %cst_28 = arith.constant -9.21034049 : f32
    %79 = arith.mulf %1, %cst_28 : f32
    %80 = vector.shape_cast %72 : vector<10x8xf32> to vector<1x10x8xf32>
    %cst_29 = arith.constant dense<0.000000e+00> : vector<1xf32>
    %81 = vector.multi_reduction <add>, %80, %cst_29 [1, 2] : vector<1x10x8xf32> to vector<1xf32>
    %82 = vector.shape_cast %81 : vector<1xf32> to vector<1x1x1xf32>
    %83 = vector.extract %82[0, 0, 0] : f32 from vector<1x1x1xf32>
    %84 = arith.mulf %79, %83 : f32
    %85 = arith.addf %78, %84 : f32
    %86 = vector.shape_cast %74 : vector<1x8xf32> to vector<1x1x8xf32>
    %cst_30 = arith.constant dense<0.000000e+00> : vector<1xf32>
    %87 = vector.multi_reduction <add>, %86, %cst_30 [1, 2] : vector<1x1x8xf32> to vector<1xf32>
    %88 = vector.shape_cast %87 : vector<1xf32> to vector<1x1x1xf32>
    %89 = vector.extract %88[0, 0, 0] : f32 from vector<1x1x1xf32>
    %90 = arith.mulf %0, %89 : f32
    %91 = arith.addf %85, %90 : f32
    %92 = vector.broadcast %91 : f32 to vector<1x8x128xf32>
    %c0_31 = arith.constant 0 : index
    %c0_32 = arith.constant 0 : index
    %c0_33 = arith.constant 0 : index
    %93 = vector.load %arg6[%c0_31, %c0_32, %c0_33] : memref<1x8x128xf32, #tpu.memory_space<vmem>>, vector<1x8x128xf32>
    tpu.vector_store %arg6[%c0_31, %c0_32, %c0_33], %92 {strides = array<i32>} : memref<1x8x128xf32, #tpu.memory_space<vmem>>, vector<1x8x128xf32>,
    return
  }
  func.func @transform_0(%arg0: i32, %arg1: memref<2xf32, #tpu.memory_space<smem>>, %arg2: memref<1xi32, #tpu.memory_space<smem>>) -> (i32, i32) {
    %c0_i32 = arith.constant 0 : i32
    %c0_i32_0 = arith.constant 0 : i32
    return %c0_i32, %arg0 : i32, i32
  }
  func.func @transform_1(%arg0: i32, %arg1: memref<2xf32, #tpu.memory_space<smem>>, %arg2: memref<1xi32, #tpu.memory_space<smem>>) -> (i32, i32) {
    %c0_i32 = arith.constant 0 : i32
    %c0_i32_0 = arith.constant 0 : i32
    return %c0_i32, %arg0 : i32, i32
  }
  func.func @transform_2(%arg0: i32, %arg1: memref<2xf32, #tpu.memory_space<smem>>, %arg2: memref<1xi32, #tpu.memory_space<smem>>) -> (i32, i32) {
    %c0_i32 = arith.constant 0 : i32
    %c0_i32_0 = arith.constant 0 : i32
    return %c0_i32, %arg0 : i32, i32
  }
  func.func @transform_3(%arg0: i32, %arg1: memref<2xf32, #tpu.memory_space<smem>>, %arg2: memref<1xi32, #tpu.memory_space<smem>>) -> (i32, i32, i32) {
    %c0_i32 = arith.constant 0 : i32
    %c0_i32_0 = arith.constant 0 : i32
    %c0_i32_1 = arith.constant 0 : i32
    return %arg0, %c0_i32, %c0_i32_0 : i32, i32, i32
  }
}

</mosaic_0001>

<llo_original>
// kernel: tpu_custom_call.1
$region0: #{tpu_custom_call.1}
  #allocation0 [shape = 'u32[]', space=smem, size = 0x4, offset = 0x4, fixed_abs, tag = 'smem constant byte address 0x4 - core index']
  #allocation1 [shape = 'u32[144,128]{1,0:T(1,128)}', space=vmem, size = 0x12000, scoped, tag = 'internal scratch']
  #allocation2 [shape = 's32[1]{0}', space=sflag, size = 0x4, scoped, tag = 'scoped memory for tpu_custom_call.1']
  #allocation3 [shape = 'u8[512]{0}', space=smem, size = 0x200, scoped, tag = 'prefetched SMEM operand 0']
  #allocation4 [shape = 's32[1]{0:T(128)S(6)}', space=smem, size = 0x200, scoped, tag = 'prefetched SMEM operand 1']
  %s0 = inlined_call_operand.vmem [shape: f32[2], index: 0, kind: input, shape index: {}]
  %s1 = inlined_call_operand.<no memory space> [shape: s32[1], index: 1, kind: input, shape index: {}]
  %s2 = inlined_call_operand.vmem [shape: f32[1,8], index: 2, kind: input, shape index: {}]
  %s3 = inlined_call_operand.vmem [shape: f32[10,8], index: 3, kind: input, shape index: {}]
  %s4 = inlined_call_operand.vmem [shape: s32[1,8], index: 4, kind: input, shape index: {}]
  %s5 = inlined_call_operand.hbm [shape: f32[1,8,128], index: 5, kind: output, shape index: {}]
  %s6 = sld [smem:[#allocation0]]
  $region22: #{tpu_custom_call.1} parent=0
    _
  %s8 = ssub.s32 1, %s6
  %s9 = scalar_select 0, %s8, %s6
  %s10 = sshll.u32 %s0, 4
  %s11 = int_to_ptr.vmem [resolvable:$true] %s10
  %13 = dma.vmem_to_smem %s11, 16, [#allocation3], [#allocation2]
  %14 = sst [smem:[#allocation4]] %s1
  %15 = dma.done [#allocation2], 16
  %16 = sfence
  $region1: #{tpu_custom_call.1} parent=0
    #allocation5 [shape = 'u8[4096]{0}', space=vmem, size = 0x1000, scoped, tag = 'output window, operand 0, single buffered']
    #allocation6 [shape = 's32[1]{0}', space=sflag, size = 0x4, scoped, tag = 'scoped memory for tpu_custom_call.1']
    %17 = vsyncpa [#allocation6], 0
    // Predicated region
    $region2: #{tpu_custom_call.1} parent=1 // pred_check
      _
    $region3: #{tpu_custom_call.1} parent=1 // pred_check_branch
      %19 = sbr.rel (0) target = $region5
    $region4: #{tpu_custom_call.1} parent=1 // pred_region
      _
    $region5: #{tpu_custom_call.1} parent=1 // pred_fallthru
      _
    // Predicated region
    $region6: #{tpu_custom_call.1} parent=1 // pred_check
      _
    $region7: #{tpu_custom_call.1} parent=1 // pred_check_branch
      %21 = sbr.rel (0) target = $region9
    $region8: #{tpu_custom_call.1} parent=1 // pred_region
      _
    $region9: #{tpu_custom_call.1} parent=1 // pred_fallthru
      _
    // Predicated region
    $region10: #{tpu_custom_call.1} parent=1 // pred_check
      _
    $region11: #{tpu_custom_call.1} parent=1 // pred_check_branch
      %23 = sbr.rel (0) target = $region13
    $region12: #{tpu_custom_call.1} parent=1 // pred_region
      _
    $region13: #{tpu_custom_call.1} parent=1 // pred_fallthru
      _
    %s24 = sld [smem:[#allocation3]]
    %s25 = sld [smem:[#allocation3 + $0x1]]
    %s26 = sld [smem:[#allocation4]]
    %s27 = smul.u32 0, 8
    %v28 = vlaneseq
    %v29 = vand.u32 %v28, 127
    %v30 = vstv %s27
    %v31 = vadd.s32 %v30, %v29
    %v32 = vstv %s26
    %vm33 = vcmp.lt.s32.totalorder %v31, %v32
    %v34 = vld [vmem:[%s2] sm:$0x1]
    %v35 = vld [vmem:[%s3] sm:$0xff]
    %v36 = vld [vmem:[%s3 + $0x8] sm:$0x3]
    %v37 = vld [vmem:[%s4] sm:$0x1]
    %v38 = vsub.f32 0.0, %v34
    %v39 = vmul.f32 %v38, 1.442695
    %v40 = vpow.pop %v39
    %v41 = vadd.f32 %v40, 1.0
    %v42 = vrcp.pop %v41
    %v43 = vmax.f32 %v42, 1e-12
    %v44 = vmin.f32 %v43, 1.0
    %v45 = vlog2.pop %v41
    %v46 = vmul.f32 %v45, 0.6931472
    %v47 = vsub.f32 0.0, %v46
    %v48 = vmax.f32 %v47, -27.631021
    %v49 = vmin.f32 %v48, 0.0
    %vm50 = vcmask 64512
    %v51 = vsel %vm50, %v35, -inf
    %vm52 = vcmask 58368
    %v53 = vsel %vm52, %v36, -inf
    %v54 = vmax.f32 %v51, %v53
    %v55 = vrot.slane %v54, 4
    %v56 = vmax.f32 %v54, %v55
    %v57 = vrot.slane %v56, 2
    %v58 = vmax.f32 %v56, %v57
    %v59 = vrot.slane %v58, 1
    %v60 = vmax.f32 %v58, %v59
    %v61 = vsub.f32 %v35, %v60
    %v62 = vsub.f32 %v36, %v60
    %v63 = vmul.f32 %v61, 1.442695
    %v64 = vpow.pop %v63
    %v65 = vmul.f32 %v62, 1.442695
    %v66 = vpow.pop %v65
    %v67 = vsel %vm50, %v64, 0.0
    %v68 = vsel %vm52, %v66, 0.0
    %v69 = vadd.f32 %v67, %v68
    %v70 = vrot.slane %v69, 4
    %v71 = vadd.f32 %v69, %v70
    %v72 = vrot.slane %v71, 2
    %v73 = vadd.f32 %v71, %v72
    %v74 = vrot.slane %v73, 1
    %v75 = vadd.f32 %v73, %v74
    %v76 = vrcp.pop %v75
    %v77 = vmul.f32 %v64, %v76
    %v78 = vmul.f32 %v66, %v76
    %v79 = vmax.f32 %v77, 1e-12
    %v80 = vmax.f32 %v78, 1e-12
    %v81 = vmin.f32 %v79, 1.0
    %v82 = vmin.f32 %v80, 1.0
    %v83 = vlaneseq
    %v84 = vshrl.u32 %v83, 7
    %v85 = vadd.s32 %v84, 8
    %v86 = vlaneseq
    %v87 = vshrl.u32 %v86, 7
    %v88 = vsub.s32 0, %v87
    %v89 = vrot.slane %v37, %v88
    %vm90 = vcmp.eq.s32.totalorder %v84, %v89
    %vm91 = vcmp.eq.s32.totalorder %v85, %v89
    %v92 = vsel %vm90, 1.0, 0.0001
    %v93 = vsel %vm91, 1.0, 0.0001
    %v95 = vlaneseq
    %v96 = vshrl.u32 %v95, 7
    %v97 = vsub.s32 0, %v96
    %v98 = vrot.slane %v44, %v97
    %v100 = vmul.f32 %v98, %v81
    %v101 = vmul.f32 %v98, %v82
    %v102 = vsub.f32 1.0, %v44
    %v104 = vlaneseq
    %v105 = vshrl.u32 %v104, 7
    %v106 = vsub.s32 0, %v105
    %v107 = vrot.slane %v102, %v106
    %v109 = vmul.f32 %v107, %v92
    %v110 = vmul.f32 %v107, %v93
    %v111 = vadd.f32 %v100, %v109
    %v112 = vadd.f32 %v101, %v110
    %v113 = vmax.f32 %v111, 1e-07
    %v114 = vmax.f32 %v112, 1e-07
    %v115 = vmin.f32 %v113, 1.0
    %v116 = vmin.f32 %v114, 1.0
    %v117 = vlog2.pop %v115
    %v118 = vmul.f32 %v117, 0.6931472
    %v119 = vlog2.pop %v116
    %v120 = vmul.f32 %v119, 0.6931472
    %v121 = vmul.f32 %v118, %v92
    %v122 = vmul.f32 %v120, %v93
    %v123 = vsel %vm33, 1, 0
    %vm124 = vcmp.eq.s32.totalorder %v123, 1
    %v125 = vsel %vm124, %v121, 0.0
    %v126 = vsel %vm124, %v122, 0.0
    %vm127 = vmxor %vm90, 1
    %vm128 = vmxor %vm91, 1
    %vm129 = vmand %vm124, %vm127
    %vm130 = vmand %vm124, %vm128
    %v131 = vsel %vm129, %v115, 0.0
    %v132 = vsel %vm130, %v116, 0.0
    %v133 = vsel %vm33, %v49, 0.0
    %v134 = vsel %vm50, %v125, 0.0
    %v135 = vsel %vm52, %v126, 0.0
    %v136 = vadd.f32 %v134, %v135
    %137 = vadd.xlane.f32.xlu0 %v136
    %v138 = vpop.xlane.xlu0 %137
    %v139 = vrot.slane %v138, 4
    %v140 = vadd.f32 %v138, %v139
    %v141 = vrot.slane %v140, 2
    %v142 = vadd.f32 %v140, %v141
    %v143 = vrot.slane %v142, 1
    %v144 = vadd.f32 %v142, %v143
    %s145 = vtos %v144
    %s146 = smul.f32 %s25, -9.2103405
    %v147 = vsel %vm50, %v131, 0.0
    %v148 = vsel %vm52, %v132, 0.0
    %v149 = vadd.f32 %v147, %v148
    %150 = vadd.xlane.f32.xlu0 %v149
    %v151 = vpop.xlane.xlu0 %150
    %v152 = vrot.slane %v151, 4
    %v153 = vadd.f32 %v151, %v152
    %v154 = vrot.slane %v153, 2
    %v155 = vadd.f32 %v153, %v154
    %v156 = vrot.slane %v155, 1
    %v157 = vadd.f32 %v155, %v156
    %s158 = vtos %v157
    %s159 = smul.f32 %s146, %s158
    %s160 = sadd.f32 %s145, %s159
    %vm161 = vcmask 57344
    %v162 = vsel %vm161, %v133, 0.0
    %163 = vadd.xlane.f32.xlu0 %v162
    %v164 = vpop.xlane.xlu0 %163
    %v165 = vrot.slane %v164, 4
    %v166 = vadd.f32 %v164, %v165
    %v167 = vrot.slane %v166, 2
    %v168 = vadd.f32 %v166, %v167
    %v169 = vrot.slane %v168, 1
    %v170 = vadd.f32 %v168, %v169
    %s171 = vtos %v170
    %s172 = smul.f32 %s24, %s171
    %s173 = sadd.f32 %s160, %s172
    %v174 = vstv %s173
    %175 = vst [vmem:[#allocation5] sm:$0xff] %v174
    // Predicated region
    $region14: #{tpu_custom_call.1} parent=1 // pred_check
      _
    $region15: #{tpu_custom_call.1} parent=1 // pred_check_branch
      %177 = sbr.rel (0) target = $region17
    $region16: #{tpu_custom_call.1} parent=1 // pred_region
      %s179 = ssub.s32 128, 128
      %180 = vsyncadd [#allocation6], %s179
      %s182 = sshll.u32 [#allocation5], 4
      %s183 = int_to_ptr.vmem [resolvable:$true] %s182
      %185 = dma.vmem_to_hbm [thread:$0]  %s183, 128, %s5, [#allocation6]
    $region17: #{tpu_custom_call.1} parent=1 // pred_fallthru
      _
    // Predicated region
    $region18: #{tpu_custom_call.1} parent=1 // pred_check
      _
    $region19: #{tpu_custom_call.1} parent=1 // pred_check_branch
      %187 = sbr.rel (0) target = $region21
    $region20: #{tpu_custom_call.1} parent=1 // pred_region
      %188 = dma.done [#allocation6], 128
    $region21: #{tpu_custom_call.1} parent=1 // pred_fallthru
      _
    %189 = vsyncpa [#allocation6], 1

</llo_original>
